<compile_context>
chip_gen: v6e
topology: v6e:2x2x1
jax: 0.10.0
libtpu: 0.0.40
codegen_flags: <defaults>
</compile_context>

<pallas_src>
import jax
import jax.numpy as jnp
from jax import lax
from jax.experimental import pallas as pl
from jax.experimental.pallas import tpu as pltpu

LANE = 128     # lane width (last dim of every vreg)
TM_MAX = 1024  # max rows per grid step (512 KiB/input/buffer in f32)


def _round_up(x, m):
    return ((x + m - 1) // m) * m


def _make_kernel(tm, total_rows, n_inner, need_mask):
    """Build the reduction kernel for a (n_outer, n_inner) grid of (tm, LANE) tiles."""

    def kernel(out_ref, img_ref, noise_ref, loss_ref, acc_ref):
        k = pl.program_id(1)

        @pl.when(k == 0)
        def _():
            acc_ref[...] = jnp.zeros_like(acc_ref)

        d = out_ref[...].astype(jnp.float32) - (
            img_ref[...].astype(jnp.float32) - noise_ref[...].astype(jnp.float32)
        )
        sq = d * d

        if need_mask:
            # Global row-block index of this tile; rows past `total_rows` are
            # garbage (boundary-padded block) and must not contribute.
            blk = pl.program_id(0) * n_inner + k
            valid = total_rows - blk * tm
            row_ids = lax.broadcasted_iota(jnp.int32, (tm, LANE), 0)
            sq = jnp.where(row_ids < valid, sq, 0.0)

        # Collapse (tm, 128) -> (8, 128): pure vreg-wise VPU adds (no XLU).
        acc_ref[...] += sq.reshape(tm // 8, 8, LANE).sum(axis=0)

        @pl.when(k == pl.num_programs(1) - 1)
        def _():
            # Single cross-lane/sublane reduction, once per outer index.
            loss_ref[...] = jnp.sum(acc_ref[...], keepdims=True)

    return kernel


def iadb_loss(out, image, noise):
    """Pallas equivalent of: torch.sum((out - (image - noise)) ** 2)."""
    assert out.shape == image.shape == noise.shape
    n = out.size
    if n == 0:
        return jnp.float32(0.0)

    flat_o = jnp.ravel(out)
    flat_i = jnp.ravel(image)
    flat_n = jnp.ravel(noise)

    M = n // LANE          # full 128-wide rows handled by the kernel
    rem = n - M * LANE     # < 128 leftover elements handled in plain JAX

    tail = jnp.float32(0.0)
    if rem:
        dt = flat_o[M * LANE:].astype(jnp.float32) - (
            flat_i[M * LANE:].astype(jnp.float32)
            - flat_n[M * LANE:].astype(jnp.float32)
        )
        tail = jnp.sum(dt * dt)

    if M == 0:
        return tail

    def main2d(x):
        if rem:
            x = x[: M * LANE]
        return x.reshape(M, LANE)   # native dtype; no pad, no cast

    o2, i2, z2 = main2d(flat_o), main2d(flat_i), main2d(flat_n)

    # Tile choice: big (amortise per-step overhead) but capped so 3 inputs x 2
    # buffers stays well inside scoped VMEM on every generation.
    tm = min(TM_MAX, _round_up(M, 8))
    m_blocks = pl.cdiv(M, tm)
    # Optional 2-way split across TensorCores (v7x); neutral on v5e/v6e.
    n_outer = 2 if (m_blocks >= 2 and m_blocks % 2 == 0) else 1
    n_inner = m_blocks // n_outer
    need_mask = (M % tm) != 0

    kernel = _make_kernel(tm, M, n_inner, need_mask)
    itemsize = jnp.dtype(o2.dtype).itemsize
    in_spec = pl.BlockSpec((tm, LANE), lambda o, k: (o * n_inner + k, 0))

    partials = pl.pallas_call(
        kernel,
        out_shape=jax.ShapeDtypeStruct((n_outer, 1), jnp.float32),
        grid_spec=pltpu.PrefetchScalarGridSpec(
            num_scalar_prefetch=0,
            grid=(n_outer, n_inner),
            in_specs=[in_spec, in_spec, in_spec],
            out_specs=pl.BlockSpec((1, 1), lambda o, k: (o, 0)),
            scratch_shapes=[pltpu.VMEM((8, LANE), jnp.float32)],
        ),
        compiler_params=pltpu.CompilerParams(
            dimension_semantics=("parallel", "arbitrary"),
        ),
        cost_estimate=pl.CostEstimate(
            flops=3 * M * LANE,
            transcendentals=0,
            bytes_accessed=3 * M * LANE * itemsize + 4 * n_outer,
        ),
    )(o2, i2, z2)

    return jnp.sum(partials) + tail


if __name__ == "__main__":
    key = jax.random.PRNGKey(0)
    k1, k2, k3 = jax.random.split(key, 3)

    # [B, 1, X, Y, Z] as documented in the module docstring
    shape = (2, 1, 4, 8, 16)
    out = jax.random.normal(k1, shape, dtype=jnp.float32)
    image = jax.random.normal(k2, shape, dtype=jnp.float32)
    noise = jax.random.normal(k3, shape, dtype=jnp.float32)

    loss = iadb_loss(out, image, noise)
    jax.block_until_ready(loss)
    ref = jnp.sum((out - (image - noise)) ** 2)
    assert jnp.allclose(loss, ref, rtol=1e-5, atol=1e-5), (loss, ref)

    # second check: element count not a multiple of the tile -> exercises the
    # in-kernel row mask and the JAX-side sub-lane tail.
    shape2 = (2, 1, 5, 9, 16)
    o2 = jax.random.normal(k1, shape2, dtype=jnp.float32)
    i2 = jax.random.normal(k2, shape2, dtype=jnp.float32)
    n2 = jax.random.normal(k3, shape2, dtype=jnp.float32)
    loss2 = iadb_loss(o2, i2, n2)
    jax.block_until_ready(loss2)
    ref2 = jnp.sum((o2 - (i2 - n2)) ** 2)
    assert jnp.allclose(loss2, ref2, rtol=1e-5, atol=1e-5), (loss2, ref2)

    print("KERNEL_OK")
</pallas_src>

<mosaic_0001>
module attributes {stable_mosaic.version = 11 : i64} {
  func.func @kernel(%arg0: i32, %arg1: i32, %arg2: memref<8x128xf32, #tpu.memory_space<vmem>>, %arg3: memref<8x128xf32, #tpu.memory_space<vmem>>, %arg4: memref<8x128xf32, #tpu.memory_space<vmem>>, %arg5: memref<1x1xf32, #tpu.memory_space<vmem>>, %arg6: memref<8x128xf32, #tpu.memory_space<vmem>>) attributes {dimension_semantics = [#tpu.dimension_semantics<parallel>, #tpu.dimension_semantics<arbitrary>], iteration_bounds = array<i64: 1, 1>, scalar_prefetch = 0 : i64, scratch_operands = 1 : i64, tpu.core_type = #tpu.core_type<tc>, window_params = [{transform_indices = @transform_0, window_bounds = array<i64: 8, 128>}, {transform_indices = @transform_1, window_bounds = array<i64: 8, 128>}, {transform_indices = @transform_2, window_bounds = array<i64: 8, 128>}, {transform_indices = @transform_3, window_bounds = array<i64: 1, 1>}]} {
    %c0_i32 = arith.constant 0 : i32
    %0 = arith.cmpi eq, %arg1, %c0_i32 : i32
    %1 = arith.extui %0 : i1 to i32
    %c0_i32_0 = arith.constant 0 : i32
    %2 = arith.cmpi ne, %1, %c0_i32_0 : i32
    scf.if %2 {
      %cst_12 = arith.constant 0.000000e+00 : f32
      %17 = vector.broadcast %cst_12 : f32 to vector<8x128xf32>
      %c0_13 = arith.constant 0 : index
      %c0_14 = arith.constant 0 : index
      %18 = vector.load %arg6[%c0_13, %c0_14] : memref<8x128xf32, #tpu.memory_space<vmem>>, vector<8x128xf32>
      tpu.vector_store %arg6[%c0_13, %c0_14], %17 {strides = array<i32>} : memref<8x128xf32, #tpu.memory_space<vmem>>, vector<8x128xf32>,
    } else {
    }
    %c0 = arith.constant 0 : index
    %c0_1 = arith.constant 0 : index
    %3 = vector.load %arg2[%c0, %c0_1] : memref<8x128xf32, #tpu.memory_space<vmem>>, vector<8x128xf32>
    %c0_2 = arith.constant 0 : index
    %c0_3 = arith.constant 0 : index
    %4 = vector.load %arg3[%c0_2, %c0_3] : memref<8x128xf32, #tpu.memory_space<vmem>>, vector<8x128xf32>
    %c0_4 = arith.constant 0 : index
    %c0_5 = arith.constant 0 : index
    %5 = vector.load %arg4[%c0_4, %c0_5] : memref<8x128xf32, #tpu.memory_space<vmem>>, vector<8x128xf32>
    %6 = arith.subf %4, %5 : vector<8x128xf32>
    %7 = arith.subf %3, %6 : vector<8x128xf32>
    %8 = arith.mulf %7, %7 : vector<8x128xf32>
    %c0_6 = arith.constant 0 : index
    %c0_7 = arith.constant 0 : index
    %9 = vector.load %arg6[%c0_6, %c0_7] : memref<8x128xf32, #tpu.memory_space<vmem>>, vector<8x128xf32>
    %10 = vector.shape_cast %8 : vector<8x128xf32> to vector<1x8x128xf32>
    %cst = arith.constant dense<0.000000e+00> : vector<8x128xf32>
    %11 = vector.multi_reduction <add>, %10, %cst [0] : vector<1x8x128xf32> to vector<8x128xf32>
    %12 = arith.addf %9, %11 : vector<8x128xf32>
    %c0_8 = arith.constant 0 : index
    %c0_9 = arith.constant 0 : index
    %13 = vector.load %arg6[%c0_8, %c0_9] : memref<8x128xf32, #tpu.memory_space<vmem>>, vector<8x128xf32>
    tpu.vector_store %arg6[%c0_8, %c0_9], %12 {strides = array<i32>} : memref<8x128xf32, #tpu.memory_space<vmem>>, vector<8x128xf32>,
    %c0_i32_10 = arith.constant 0 : i32
    %14 = arith.cmpi eq, %arg1, %c0_i32_10 : i32
    %15 = arith.extui %14 : i1 to i32
    %c0_i32_11 = arith.constant 0 : i32
    %16 = arith.cmpi ne, %15, %c0_i32_11 : i32
    scf.if %16 {
      %c0_12 = arith.constant 0 : index
      %c0_13 = arith.constant 0 : index
      %17 = vector.load %arg6[%c0_12, %c0_13] : memref<8x128xf32, #tpu.memory_space<vmem>>, vector<8x128xf32>
      %18 = vector.shape_cast %17 : vector<8x128xf32> to vector<1x8x128xf32>
      %cst_14 = arith.constant dense<0.000000e+00> : vector<1xf32>
      %19 = vector.multi_reduction <add>, %18, %cst_14 [1, 2] : vector<1x8x128xf32> to vector<1xf32>
      %20 = vector.shape_cast %19 : vector<1xf32> to vector<1x1x1xf32>
      %21 = vector.extract %20[0, 0, 0] : f32 from vector<1x1x1xf32>
      %22 = vector.broadcast %21 : f32 to vector<1x1xf32>
      %c0_15 = arith.constant 0 : index
      %c0_16 = arith.constant 0 : index
      %23 = vector.load %arg5[%c0_15, %c0_16] : memref<1x1xf32, #tpu.memory_space<vmem>>, vector<1x1xf32>
      tpu.vector_store %arg5[%c0_15, %c0_16], %22 {strides = array<i32>} : memref<1x1xf32, #tpu.memory_space<vmem>>, vector<1x1xf32>,
    } else {
    }
    return
  }
  func.func @transform_0(%arg0: i32, %arg1: i32) -> (i32, i32) {
    %c1_i32 = arith.constant 1 : i32
    %0 = arith.muli %arg0, %c1_i32 : i32
    %1 = arith.addi %0, %arg1 : i32
    %c0_i32 = arith.constant 0 : i32
    %c0_i32_0 = arith.constant 0 : i32
    return %1, %c0_i32 : i32, i32
  }
  func.func @transform_1(%arg0: i32, %arg1: i32) -> (i32, i32) {
    %c1_i32 = arith.constant 1 : i32
    %0 = arith.muli %arg0, %c1_i32 : i32
    %1 = arith.addi %0, %arg1 : i32
    %c0_i32 = arith.constant 0 : i32
    %c0_i32_0 = arith.constant 0 : i32
    return %1, %c0_i32 : i32, i32
  }
  func.func @transform_2(%arg0: i32, %arg1: i32) -> (i32, i32) {
    %c1_i32 = arith.constant 1 : i32
    %0 = arith.muli %arg0, %c1_i32 : i32
    %1 = arith.addi %0, %arg1 : i32
    %c0_i32 = arith.constant 0 : i32
    %c0_i32_0 = arith.constant 0 : i32
    return %1, %c0_i32 : i32, i32
  }
  func.func @transform_3(%arg0: i32, %arg1: i32) -> (i32, i32) {
    %c0_i32 = arith.constant 0 : i32
    %c0_i32_0 = arith.constant 0 : i32
    return %arg0, %c0_i32 : i32, i32
  }
}

</mosaic_0001>

<llo_original>
// kernel: tpu_custom_call.1
$region0: #{tpu_custom_call.1}
  #allocation0 [shape = 'u32[]', space=smem, size = 0x4, offset = 0x4, fixed_abs, tag = 'smem constant byte address 0x4 - core index']
  #allocation1 [shape = 'u32[144,128]{1,0:T(1,128)}', space=vmem, size = 0x12000, scoped, tag = 'internal scratch']
  #allocation2 [shape = 'f32[8,128]{1,0:T(8,128)}', space=vmem, size = 0x1000, scoped, tag = 'scratch operand']
  %s0 = inlined_call_operand.hbm [shape: f32[8,128], index: 0, kind: input, shape index: {}]
  %s1 = inlined_call_operand.hbm [shape: f32[8,128], index: 1, kind: input, shape index: {}]
  %s2 = inlined_call_operand.hbm [shape: f32[8,128], index: 2, kind: input, shape index: {}]
  %s3 = inlined_call_operand.hbm [shape: f32[1,1], index: 3, kind: output, shape index: {}]
  %s4 = sld [smem:[#allocation0]]
  $region42: #{tpu_custom_call.1} parent=0
    _
  %s6 = ssub.s32 1, %s4
  %s7 = scalar_select 0, %s6, %s4
  $region1: #{tpu_custom_call.1} parent=0
    #allocation3 [shape = 'u8[4096]{0}', space=vmem, size = 0x1000, scoped, tag = 'input window, operand 0, single buffered']
    #allocation4 [shape = 's32[1]{0}', space=sflag, size = 0x4, scoped, tag = 'scoped memory for tpu_custom_call.1']
    #allocation5 [shape = 's32[1]{0}', space=sflag, size = 0x4, scoped, tag = 'scoped memory for tpu_custom_call.1']
    #allocation6 [shape = 'u8[4096]{0}', space=vmem, size = 0x1000, scoped, tag = 'input window, operand 1, single buffered']
    #allocation7 [shape = 's32[1]{0}', space=sflag, size = 0x4, scoped, tag = 'scoped memory for tpu_custom_call.1']
    #allocation8 [shape = 'u8[4096]{0}', space=vmem, size = 0x1000, scoped, tag = 'input window, operand 2, single buffered']
    #allocation9 [shape = 'u8[512]{0}', space=vmem, size = 0x400, scoped, tag = 'output window, operand 0, single buffered']
    %8 = vsyncpa [#allocation4], 0
    %9 = vsyncpa [#allocation7], 0
    %10 = vsyncpa [#allocation5], 0
    // Predicated region
    $region2: #{tpu_custom_call.1} parent=1 // pred_check
      _
    $region3: #{tpu_custom_call.1} parent=1 // pred_check_branch
      %12 = sbr.rel (0) target = $region5
    $region4: #{tpu_custom_call.1} parent=1 // pred_region
      %s13 = sadd.s32 0, 0
      %s15 = ssub.s32 128, 128
      %16 = vsyncadd [#allocation4], %s15
      %s17 = smul.addr %s13, 128
      %s18 = scalar_lea.hbm %s0, %s17
      %s20 = sshll.u32 [#allocation3], 4
      %s21 = int_to_ptr.vmem [resolvable:$true] %s20
      %23 = dma.hbm_to_vmem [thread:$0]  %s18, 128, %s21, [#allocation4]
    $region5: #{tpu_custom_call.1} parent=1 // pred_fallthru
      _
    // Predicated region
    $region6: #{tpu_custom_call.1} parent=1 // pred_check
      _
    $region7: #{tpu_custom_call.1} parent=1 // pred_check_branch
      %25 = sbr.rel (0) target = $region9
    $region8: #{tpu_custom_call.1} parent=1 // pred_region
      %s26 = sadd.s32 0, 0
      %s28 = ssub.s32 128, 128
      %29 = vsyncadd [#allocation7], %s28
      %s30 = smul.addr %s26, 128
      %s31 = scalar_lea.hbm %s1, %s30
      %s33 = sshll.u32 [#allocation6], 4
      %s34 = int_to_ptr.vmem [resolvable:$true] %s33
      %36 = dma.hbm_to_vmem [thread:$0]  %s31, 128, %s34, [#allocation7]
    $region9: #{tpu_custom_call.1} parent=1 // pred_fallthru
      _
    // Predicated region
    $region10: #{tpu_custom_call.1} parent=1 // pred_check
      _
    $region11: #{tpu_custom_call.1} parent=1 // pred_check_branch
      %38 = sbr.rel (0) target = $region13
    $region12: #{tpu_custom_call.1} parent=1 // pred_region
      %s39 = sadd.s32 0, 0
      %s41 = ssub.s32 128, 128
      %42 = vsyncadd [#allocation7], %s41
      %s43 = smul.addr %s39, 128
      %s44 = scalar_lea.hbm %s2, %s43
      %s46 = sshll.u32 [#allocation8], 4
      %s47 = int_to_ptr.vmem [resolvable:$true] %s46
      %49 = dma.hbm_to_vmem [thread:$0]  %s44, 128, %s47, [#allocation7]
    $region13: #{tpu_custom_call.1} parent=1 // pred_fallthru
      _
    // Predicated region
    $region14: #{tpu_custom_call.1} parent=1 // pred_check
      _
    $region15: #{tpu_custom_call.1} parent=1 // pred_check_branch
      %51 = sbr.rel (0) target = $region17
    $region16: #{tpu_custom_call.1} parent=1 // pred_region
      %52 = dma.done [#allocation4], 128
    $region17: #{tpu_custom_call.1} parent=1 // pred_fallthru
      _
    // Predicated region
    $region18: #{tpu_custom_call.1} parent=1 // pred_check
      _
    $region19: #{tpu_custom_call.1} parent=1 // pred_check_branch
      %54 = sbr.rel (0) target = $region21
    $region20: #{tpu_custom_call.1} parent=1 // pred_region
      %55 = dma.done [#allocation7], 128
    $region21: #{tpu_custom_call.1} parent=1 // pred_fallthru
      _
    // Predicated region
    $region22: #{tpu_custom_call.1} parent=1 // pred_check
      _
    $region23: #{tpu_custom_call.1} parent=1 // pred_check_branch
      %57 = sbr.rel (0) target = $region25
    $region24: #{tpu_custom_call.1} parent=1 // pred_region
      %58 = dma.done [#allocation7], 128
    $region25: #{tpu_custom_call.1} parent=1 // pred_fallthru
      _
    %s59 = sadd.s32 0, 0
    %s60 = sadd.s32 0, 0
    %s61 = sadd.s32 0, 0
    %p62 = scmp.eq.s32.totalorder 0, 0
    // Predicated region
    $region26: #{tpu_custom_call.1} parent=1 // pred_check
      %p63 = pneg %p62
    $region27: #{tpu_custom_call.1} parent=1 // pred_check_branch
      %65 = sbr.rel (%p63) target = $region29
    $region28: #{tpu_custom_call.1} parent=1 // pred_region
      %66 = vst [vmem:[#allocation2] sm:$0xff] 0.0
    $region29: #{tpu_custom_call.1} parent=1 // pred_fallthru
      _
    %v67 = vld [vmem:[#allocation3] sm:$0xff]
    %v68 = vld [vmem:[#allocation6] sm:$0xff]
    %v69 = vld [vmem:[#allocation8] sm:$0xff]
    %v70 = vsub.f32 %v68, %v69
    %v71 = vsub.f32 %v67, %v70
    %v72 = vmul.f32 %v71, %v71
    %v73 = vld [vmem:[#allocation2] sm:$0xff]
    %v74 = vadd.f32 %v72, 0.0
    %v75 = vadd.f32 %v73, %v74
    %76 = vst [vmem:[#allocation2] sm:$0xff] %v75
    // Predicated region
    $region30: #{tpu_custom_call.1} parent=1 // pred_check
      %p77 = pneg %p62
    $region31: #{tpu_custom_call.1} parent=1 // pred_check_branch
      %79 = sbr.rel (%p77) target = $region33
    $region32: #{tpu_custom_call.1} parent=1 // pred_region
      %v80 = vld [vmem:[#allocation2] sm:$0xff]
      %81 = vadd.xlane.f32.xlu0 %v80
      %v82 = vpop.xlane.xlu0 %81
      %v83 = vrot.slane %v82, 4
      %v84 = vadd.f32 %v82, %v83
      %v85 = vrot.slane %v84, 2
      %v86 = vadd.f32 %v84, %v85
      %v87 = vrot.slane %v86, 1
      %v88 = vadd.f32 %v86, %v87
      %s89 = vtos %v88
      %v90 = vstv %s89
      %vm91 = vcmask 0
      %92 = vst.msk [vmem:[#allocation9] sm:$0x1] %vm91, %v90
    $region33: #{tpu_custom_call.1} parent=1 // pred_fallthru
      _
    // Predicated region
    $region34: #{tpu_custom_call.1} parent=1 // pred_check
      _
    $region35: #{tpu_custom_call.1} parent=1 // pred_check_branch
      %94 = sbr.rel (0) target = $region37
    $region36: #{tpu_custom_call.1} parent=1 // pred_region
      %s96 = ssub.s32 16, 16
      %97 = vsyncadd [#allocation5], %s96
      %s99 = sshll.u32 [#allocation9], 4
      %s100 = int_to_ptr.vmem [resolvable:$true] %s99
      %102 = dma.vmem_to_hbm [thread:$0]  %s100, 16, %s3, [#allocation5]
    $region37: #{tpu_custom_call.1} parent=1 // pred_fallthru
      _
    // Predicated region
    $region38: #{tpu_custom_call.1} parent=1 // pred_check
      _
    $region39: #{tpu_custom_call.1} parent=1 // pred_check_branch
      %104 = sbr.rel (0) target = $region41
    $region40: #{tpu_custom_call.1} parent=1 // pred_region
      %105 = dma.done [#allocation5], 16
    $region41: #{tpu_custom_call.1} parent=1 // pred_fallthru
      _
    %106 = vsyncpa [#allocation4], 1
    %107 = vsyncpa [#allocation7], 1
    %108 = vsyncpa [#allocation5], 1

</llo_original>
